<compile_context>
chip_gen: v5e
topology: v5e:2x2
jax: 0.10.0
libtpu: 0.0.40
codegen_flags: <defaults>
</compile_context>

<pallas_src>
import jax
import jax.numpy as jnp
from jax.experimental import pallas as pl
from jax.experimental.pallas import tpu as pltpu


def _round_up(n: int, m: int) -> int:
    return ((n + m - 1) // m) * m


def mlp_kernel(x_ref, w1_ref, b1_ref, w2_ref, b2_ref, w3_ref, b3_ref, o_ref):
    # x_ref: (9, TILE_B) ; w1: (64, 9) ; w2: (16, 64) ; w3: (3, 16) ; biases: (out, 1)
    x = x_ref[...].astype(jnp.float32)

    h1 = jnp.dot(w1_ref[...], x, preferred_element_type=jnp.float32) + b1_ref[...]
    h1 = jnp.maximum(h1, 0.0)

    h2 = jnp.dot(w2_ref[...], h1, preferred_element_type=jnp.float32) + b2_ref[...]
    h2 = jnp.maximum(h2, 0.0)

    logits = jnp.dot(w3_ref[...], h2, preferred_element_type=jnp.float32) + b3_ref[...]
    o_ref[...] = logits.astype(o_ref.dtype)


def neural_network_forward(x, params, tile_b: int = 2048):
    """x: (B, 9) float32. params: w{1,2,3} in (out, in) layout, b{1,2,3} as (out, 1).

    Returns logits of shape (B, 3). For production tiny-batch calls (B in the tens),
    plain XLA (reference_forward) is cheaper than a pallas_call launch; the Pallas
    path is meant for large-batch inference.
    """
    B = x.shape[0]
    x2 = jnp.reshape(x, (B, -1)).astype(jnp.float32)  # nn.Flatten-equivalent
    assert x2.shape[1] == 9, x2.shape

    w1, b1 = params["w1"], params["b1"]
    w2, b2 = params["w2"], params["b2"]
    w3, b3 = params["w3"], params["b3"]

    # Batch on the lane axis: pad B up to a multiple of the lane-aligned tile.
    tile = min(tile_b, _round_up(B, 128))
    tile = _round_up(tile, 128)
    Bp = _round_up(B, tile)

    xT = jnp.transpose(x2)                        # (9, B)
    if Bp != B:
        xT = jnp.pad(xT, ((0, 0), (0, Bp - B)))   # zero columns are independent -> harmless

    grid = (Bp // tile,)
    resident = lambda a: pl.BlockSpec(a.shape, lambda i: (0, 0))  # stays in VMEM across steps

    out_t = pl.pallas_call(
        mlp_kernel,
        out_shape=jax.ShapeDtypeStruct((3, Bp), jnp.float32),
        grid_spec=pl.GridSpec(
            grid=grid,
            in_specs=[
                pl.BlockSpec((9, tile), lambda i: (0, i)),   # x tile: lane-dense DMA
                resident(w1), resident(b1),
                resident(w2), resident(b2),
                resident(w3), resident(b3),
            ],
            out_specs=pl.BlockSpec((3, tile), lambda i: (0, i)),  # lane-dense store
        ),
        compiler_params=pltpu.CompilerParams(
            dimension_semantics=("parallel",),   # megacore sharding on v7x, free elsewhere
        ),
    )(xT, w1, b1, w2, b2, w3, b3)

    return jnp.transpose(out_t[:, :B])            # (B, 3)


def init_params(key):
    """Deterministic init mimicking nn.Linear's default U(-1/sqrt(fan_in), 1/sqrt(fan_in)).

    Weights are stored (out, in) — same as PyTorch — and biases as (out, 1) columns.
    """
    dims = [(9, 64), (64, 16), (16, 3)]
    params = {}
    for i, (fan_in, fan_out) in enumerate(dims, start=1):
        key, kw, kb = jax.random.split(key, 3)
        bound = 1.0 / (fan_in ** 0.5)
        params[f"w{i}"] = jax.random.uniform(
            kw, (fan_out, fan_in), jnp.float32, minval=-bound, maxval=bound
        )
        params[f"b{i}"] = jax.random.uniform(
            kb, (fan_out, 1), jnp.float32, minval=-bound, maxval=bound
        )
    return params


def reference_forward(x, params):
    h = jnp.maximum(x @ params["w1"].T + params["b1"].T, 0.0)
    h = jnp.maximum(h @ params["w2"].T + params["b2"].T, 0.0)
    return h @ params["w3"].T + params["b3"].T


if __name__ == "__main__":
    key = jax.random.PRNGKey(0)
    key, kx = jax.random.split(key)
    B = 8
    x = jax.random.normal(kx, (B, 9), dtype=jnp.float32)

    params = init_params(key)

    out = neural_network_forward(x, params)
    out = jax.block_until_ready(out)

    ref = reference_forward(x, params)
    assert out.shape == (B, 3), out.shape
    assert jnp.allclose(out, ref, atol=1e-4, rtol=1e-4), "mismatch vs reference"

    print("KERNEL_OK")
</pallas_src>

<mosaic_0001>
module attributes {stable_mosaic.version = 11 : i64} {
  func.func @mlp_kernel(%arg0: i32, %arg1: memref<9x128xf32, #tpu.memory_space<vmem>>, %arg2: memref<64x9xf32, #tpu.memory_space<vmem>>, %arg3: memref<64x1xf32, #tpu.memory_space<vmem>>, %arg4: memref<16x64xf32, #tpu.memory_space<vmem>>, %arg5: memref<16x1xf32, #tpu.memory_space<vmem>>, %arg6: memref<3x16xf32, #tpu.memory_space<vmem>>, %arg7: memref<3x1xf32, #tpu.memory_space<vmem>>, %arg8: memref<3x128xf32, #tpu.memory_space<vmem>>) attributes {dimension_semantics = [#tpu.dimension_semantics<parallel>], iteration_bounds = array<i64: 1>, scalar_prefetch = 0 : i64, scratch_operands = 0 : i64, tpu.core_type = #tpu.core_type<tc>, window_params = [{transform_indices = @transform_0, window_bounds = array<i64: 9, 128>}, {pipeline_mode = #tpu.pipeline_mode<synchronous>, transform_indices = @transform_1, window_bounds = array<i64: 64, 9>}, {pipeline_mode = #tpu.pipeline_mode<synchronous>, transform_indices = @transform_2, window_bounds = array<i64: 64, 1>}, {pipeline_mode = #tpu.pipeline_mode<synchronous>, transform_indices = @transform_3, window_bounds = array<i64: 16, 64>}, {pipeline_mode = #tpu.pipeline_mode<synchronous>, transform_indices = @transform_4, window_bounds = array<i64: 16, 1>}, {pipeline_mode = #tpu.pipeline_mode<synchronous>, transform_indices = @transform_5, window_bounds = array<i64: 3, 16>}, {pipeline_mode = #tpu.pipeline_mode<synchronous>, transform_indices = @transform_6, window_bounds = array<i64: 3, 1>}, {transform_indices = @transform_7, window_bounds = array<i64: 3, 128>}]} {
    %c0 = arith.constant 0 : index
    %c0_0 = arith.constant 0 : index
    %0 = vector.load %arg1[%c0, %c0_0] : memref<9x128xf32, #tpu.memory_space<vmem>>, vector<9x128xf32>
    %c0_1 = arith.constant 0 : index
    %c0_2 = arith.constant 0 : index
    %1 = vector.load %arg2[%c0_1, %c0_2] : memref<64x9xf32, #tpu.memory_space<vmem>>, vector<64x9xf32>
    %cst = arith.constant dense<0.000000e+00> : vector<64x128xf32>
    %2 = tpu.matmul %1, %0, %cst {dimension_numbers = #tpu.dot_dimension_numbers<[1], [0], [0], [1], [0, 0, 1, 1], [], []>} : vector<64x9xf32>, vector<9x128xf32>, vector<64x128xf32> -> vector<64x128xf32>
    %c0_3 = arith.constant 0 : index
    %c0_4 = arith.constant 0 : index
    %3 = vector.load %arg3[%c0_3, %c0_4] : memref<64x1xf32, #tpu.memory_space<vmem>>, vector<64x1xf32>
    %4 = vector.broadcast %3 : vector<64x1xf32> to vector<64x128xf32>
    %5 = arith.addf %2, %4 : vector<64x128xf32>
    %cst_5 = arith.constant 0.000000e+00 : f32
    %6 = vector.broadcast %cst_5 : f32 to vector<64x128xf32>
    %7 = arith.maximumf %5, %6 : vector<64x128xf32>
    %c0_6 = arith.constant 0 : index
    %c0_7 = arith.constant 0 : index
    %8 = vector.load %arg4[%c0_6, %c0_7] : memref<16x64xf32, #tpu.memory_space<vmem>>, vector<16x64xf32>
    %cst_8 = arith.constant dense<0.000000e+00> : vector<16x128xf32>
    %9 = tpu.matmul %8, %7, %cst_8 {dimension_numbers = #tpu.dot_dimension_numbers<[1], [0], [0], [1], [0, 0, 1, 1], [], []>} : vector<16x64xf32>, vector<64x128xf32>, vector<16x128xf32> -> vector<16x128xf32>
    %c0_9 = arith.constant 0 : index
    %c0_10 = arith.constant 0 : index
    %10 = vector.load %arg5[%c0_9, %c0_10] : memref<16x1xf32, #tpu.memory_space<vmem>>, vector<16x1xf32>
    %11 = vector.broadcast %10 : vector<16x1xf32> to vector<16x128xf32>
    %12 = arith.addf %9, %11 : vector<16x128xf32>
    %cst_11 = arith.constant 0.000000e+00 : f32
    %13 = vector.broadcast %cst_11 : f32 to vector<16x128xf32>
    %14 = arith.maximumf %12, %13 : vector<16x128xf32>
    %c0_12 = arith.constant 0 : index
    %c0_13 = arith.constant 0 : index
    %15 = vector.load %arg6[%c0_12, %c0_13] : memref<3x16xf32, #tpu.memory_space<vmem>>, vector<3x16xf32>
    %cst_14 = arith.constant dense<0.000000e+00> : vector<3x128xf32>
    %16 = tpu.matmul %15, %14, %cst_14 {dimension_numbers = #tpu.dot_dimension_numbers<[1], [0], [0], [1], [0, 0, 1, 1], [], []>} : vector<3x16xf32>, vector<16x128xf32>, vector<3x128xf32> -> vector<3x128xf32>
    %c0_15 = arith.constant 0 : index
    %c0_16 = arith.constant 0 : index
    %17 = vector.load %arg7[%c0_15, %c0_16] : memref<3x1xf32, #tpu.memory_space<vmem>>, vector<3x1xf32>
    %18 = vector.broadcast %17 : vector<3x1xf32> to vector<3x128xf32>
    %19 = arith.addf %16, %18 : vector<3x128xf32>
    %c0_17 = arith.constant 0 : index
    %c0_18 = arith.constant 0 : index
    %20 = vector.load %arg8[%c0_17, %c0_18] : memref<3x128xf32, #tpu.memory_space<vmem>>, vector<3x128xf32>
    tpu.vector_store %arg8[%c0_17, %c0_18], %19 {strides = array<i32>} : memref<3x128xf32, #tpu.memory_space<vmem>>, vector<3x128xf32>,
    return
  }
  func.func @transform_0(%arg0: i32) -> (i32, i32) {
    %c0_i32 = arith.constant 0 : i32
    %c0_i32_0 = arith.constant 0 : i32
    return %c0_i32, %arg0 : i32, i32
  }
  func.func @transform_1(%arg0: i32) -> (i32, i32) {
    %c0_i32 = arith.constant 0 : i32
    %c0_i32_0 = arith.constant 0 : i32
    %c0_i32_1 = arith.constant 0 : i32
    return %c0_i32, %c0_i32_0 : i32, i32
  }
  func.func @transform_2(%arg0: i32) -> (i32, i32) {
    %c0_i32 = arith.constant 0 : i32
    %c0_i32_0 = arith.constant 0 : i32
    %c0_i32_1 = arith.constant 0 : i32
    return %c0_i32, %c0_i32_0 : i32, i32
  }
  func.func @transform_3(%arg0: i32) -> (i32, i32) {
    %c0_i32 = arith.constant 0 : i32
    %c0_i32_0 = arith.constant 0 : i32
    %c0_i32_1 = arith.constant 0 : i32
    return %c0_i32, %c0_i32_0 : i32, i32
  }
  func.func @transform_4(%arg0: i32) -> (i32, i32) {
    %c0_i32 = arith.constant 0 : i32
    %c0_i32_0 = arith.constant 0 : i32
    %c0_i32_1 = arith.constant 0 : i32
    return %c0_i32, %c0_i32_0 : i32, i32
  }
  func.func @transform_5(%arg0: i32) -> (i32, i32) {
    %c0_i32 = arith.constant 0 : i32
    %c0_i32_0 = arith.constant 0 : i32
    %c0_i32_1 = arith.constant 0 : i32
    return %c0_i32, %c0_i32_0 : i32, i32
  }
  func.func @transform_6(%arg0: i32) -> (i32, i32) {
    %c0_i32 = arith.constant 0 : i32
    %c0_i32_0 = arith.constant 0 : i32
    %c0_i32_1 = arith.constant 0 : i32
    return %c0_i32, %c0_i32_0 : i32, i32
  }
  func.func @transform_7(%arg0: i32) -> (i32, i32) {
    %c0_i32 = arith.constant 0 : i32
    %c0_i32_0 = arith.constant 0 : i32
    return %c0_i32, %arg0 : i32, i32
  }
}

</mosaic_0001>

<llo_original>
// kernel: tpu_custom_call.1
$region0: #{tpu_custom_call.1}
  #allocation0 [shape = 'u32[]', space=smem, size = 0x4, offset = 0x4, fixed_abs, tag = 'smem constant byte address 0x4 - core index']
  #allocation1 [shape = 'u32[72,128]{1,0:T(1,128)}', space=vmem, size = 0x9000, scoped, tag = 'internal scratch']
  %s0 = inlined_call_operand.vmem [shape: f32[9,128], index: 0, kind: input, shape index: {}]
  %s1 = inlined_call_operand.vmem [shape: f32[64,9], index: 1, kind: input, shape index: {}]
  %s2 = inlined_call_operand.vmem [shape: f32[64,1], index: 2, kind: input, shape index: {}]
  %s3 = inlined_call_operand.vmem [shape: f32[16,64], index: 3, kind: input, shape index: {}]
  %s4 = inlined_call_operand.vmem [shape: f32[16,1], index: 4, kind: input, shape index: {}]
  %s5 = inlined_call_operand.vmem [shape: f32[3,16], index: 5, kind: input, shape index: {}]
  %s6 = inlined_call_operand.vmem [shape: f32[3,1], index: 6, kind: input, shape index: {}]
  %s7 = inlined_call_operand.hbm [shape: f32[3,128], index: 7, kind: output, shape index: {}]
  %s8 = sld [smem:[#allocation0]]
  $region38: #{tpu_custom_call.1} parent=0
    _
  %s10 = ssub.s32 1, %s8
  %s11 = scalar_select 0, %s10, %s8
  $region1: #{tpu_custom_call.1} parent=0
    #allocation2 [shape = 'u8[2048]{0}', space=vmem, size = 0x800, scoped, tag = 'output window, operand 0, single buffered']
    #allocation3 [shape = 's32[1]{0}', space=sflag, size = 0x4, scoped, tag = 'scoped memory for tpu_custom_call.1']
    %12 = vsyncpa [#allocation3], 0
    // Predicated region
    $region2: #{tpu_custom_call.1} parent=1 // pred_check
      _
    $region3: #{tpu_custom_call.1} parent=1 // pred_check_branch
      %14 = sbr.rel (0) target = $region5
    $region4: #{tpu_custom_call.1} parent=1 // pred_region
      _
    $region5: #{tpu_custom_call.1} parent=1 // pred_fallthru
      _
    // Predicated region
    $region6: #{tpu_custom_call.1} parent=1 // pred_check
      _
    $region7: #{tpu_custom_call.1} parent=1 // pred_check_branch
      %16 = sbr.rel (0) target = $region9
    $region8: #{tpu_custom_call.1} parent=1 // pred_region
      _
    $region9: #{tpu_custom_call.1} parent=1 // pred_fallthru
      _
    // Predicated region
    $region10: #{tpu_custom_call.1} parent=1 // pred_check
      _
    $region11: #{tpu_custom_call.1} parent=1 // pred_check_branch
      %18 = sbr.rel (0) target = $region13
    $region12: #{tpu_custom_call.1} parent=1 // pred_region
      _
    $region13: #{tpu_custom_call.1} parent=1 // pred_fallthru
      _
    // Predicated region
    $region14: #{tpu_custom_call.1} parent=1 // pred_check
      _
    $region15: #{tpu_custom_call.1} parent=1 // pred_check_branch
      %20 = sbr.rel (0) target = $region17
    $region16: #{tpu_custom_call.1} parent=1 // pred_region
      _
    $region17: #{tpu_custom_call.1} parent=1 // pred_fallthru
      _
    // Predicated region
    $region18: #{tpu_custom_call.1} parent=1 // pred_check
      _
    $region19: #{tpu_custom_call.1} parent=1 // pred_check_branch
      %22 = sbr.rel (0) target = $region21
    $region20: #{tpu_custom_call.1} parent=1 // pred_region
      _
    $region21: #{tpu_custom_call.1} parent=1 // pred_fallthru
      _
    // Predicated region
    $region22: #{tpu_custom_call.1} parent=1 // pred_check
      _
    $region23: #{tpu_custom_call.1} parent=1 // pred_check_branch
      %24 = sbr.rel (0) target = $region25
    $region24: #{tpu_custom_call.1} parent=1 // pred_region
      _
    $region25: #{tpu_custom_call.1} parent=1 // pred_fallthru
      _
    // Predicated region
    $region26: #{tpu_custom_call.1} parent=1 // pred_check
      _
    $region27: #{tpu_custom_call.1} parent=1 // pred_check_branch
      %26 = sbr.rel (0) target = $region29
    $region28: #{tpu_custom_call.1} parent=1 // pred_region
      _
    $region29: #{tpu_custom_call.1} parent=1 // pred_fallthru
      _
    %v27 = vld [vmem:[%s0] sm:$0xff]
    %v28 = vld [vmem:[%s0 + $0x8] sm:$0x1]
    %v29 = vld [vmem:[%s1] sm:$0xff]
    %v30 = vld [vmem:[%s1 + $0x8] sm:$0xff]
    %v31 = vld [vmem:[%s1 + $0x10] sm:$0xff]
    %v32 = vld [vmem:[%s1 + $0x18] sm:$0xff]
    %v33 = vld [vmem:[%s1 + $0x20] sm:$0xff]
    %v34 = vld [vmem:[%s1 + $0x28] sm:$0xff]
    %v35 = vld [vmem:[%s1 + $0x30] sm:$0xff]
    %v36 = vld [vmem:[%s1 + $0x38] sm:$0xff]
    %v37 = vld [vmem:[%s2] sm:$0xff]
    %v38 = vld [vmem:[%s2 + $0x8] sm:$0xff]
    %v39 = vld [vmem:[%s2 + $0x10] sm:$0xff]
    %v40 = vld [vmem:[%s2 + $0x18] sm:$0xff]
    %v41 = vld [vmem:[%s2 + $0x20] sm:$0xff]
    %v42 = vld [vmem:[%s2 + $0x28] sm:$0xff]
    %v43 = vld [vmem:[%s2 + $0x30] sm:$0xff]
    %v44 = vld [vmem:[%s2 + $0x38] sm:$0xff]
    %46 = vset.pattern.permute.xlu0 0
    %47 = vperm.xlu0 %46, %v37
    %v48 = vpop.permute.xlu0 %47
    %51 = vset.pattern.permute.xlu0 0
    %52 = vperm.xlu0 %51, %v38
    %v53 = vpop.permute.xlu0 %52
    %56 = vset.pattern.permute.xlu0 0
    %57 = vperm.xlu0 %56, %v39
    %v58 = vpop.permute.xlu0 %57
    %61 = vset.pattern.permute.xlu0 0
    %62 = vperm.xlu0 %61, %v40
    %v63 = vpop.permute.xlu0 %62
    %66 = vset.pattern.permute.xlu0 0
    %67 = vperm.xlu0 %66, %v41
    %v68 = vpop.permute.xlu0 %67
    %71 = vset.pattern.permute.xlu0 0
    %72 = vperm.xlu0 %71, %v42
    %v73 = vpop.permute.xlu0 %72
    %76 = vset.pattern.permute.xlu0 0
    %77 = vperm.xlu0 %76, %v43
    %v78 = vpop.permute.xlu0 %77
    %81 = vset.pattern.permute.xlu0 0
    %82 = vperm.xlu0 %81, %v44
    %v83 = vpop.permute.xlu0 %82
    %vm85 = vcmask 72704
    %v87 = vsel %vm85, %v29, 0
    %v90 = vsel %vm85, %v30, 0
    %v93 = vsel %vm85, %v31, 0
    %v96 = vsel %vm85, %v32, 0
    %v99 = vsel %vm85, %v33, 0
    %v102 = vsel %vm85, %v34, 0
    %v105 = vsel %vm85, %v35, 0
    %v108 = vsel %vm85, %v36, 0
    %vm110 = vcmask 1040384
    %v112 = vsel %vm110, %v28, 0
    %114 = vmatpush.msra.mxu0 0.0
    %115 = vmatpush.msra.mxu0 0.0
    %116 = vmatpush.msra.mxu0 0.0
    %117 = vmatpush.msra.mxu0 0.0
    %118 = vmatpush.msra.mxu0 0.0
    %119 = vmatpush.msra.mxu0 0.0
    %120 = vmatpush.msra.mxu0 0.0
    %121 = vmatpush.msra.mxu0 0.0
    %122 = vmatpush.msra.mxu0 0.0
    %123 = vmatpush.msra.mxu0 0.0
    %124 = vmatpush.msra.mxu0 0.0
    %125 = vmatpush.msra.mxu0 0.0
    %126 = vmatpush.msra.mxu0 0.0
    %127 = vmatpush.msra.mxu0 0.0
    %128 = vmatpush.msra.mxu0 %v112
    %129 = vmatpush.msra.mxu0 %v27
    %130 = vmatmul.f32.gmra.mxu0 %v87
    %v131 = vpop.f32.mrf.mxu0
    %v132 = vadd.f32 %v48, %v131
    %133 = vmatmul.f32.gmra.mxu0 %v90
    %v134 = vpop.f32.mrf.mxu0
    %v135 = vadd.f32 %v53, %v134
    %136 = vmatmul.f32.gmra.mxu0 %v93
    %v137 = vpop.f32.mrf.mxu0
    %v138 = vadd.f32 %v58, %v137
    %139 = vmatmul.f32.gmra.mxu0 %v96
    %v140 = vpop.f32.mrf.mxu0
    %v141 = vadd.f32 %v63, %v140
    %142 = vmatmul.f32.gmra.mxu0 %v99
    %v143 = vpop.f32.mrf.mxu0
    %v144 = vadd.f32 %v68, %v143
    %145 = vmatmul.f32.gmra.mxu0 %v102
    %v146 = vpop.f32.mrf.mxu0
    %v147 = vadd.f32 %v73, %v146
    %148 = vmatmul.f32.gmra.mxu0 %v105
    %v149 = vpop.f32.mrf.mxu0
    %v150 = vadd.f32 %v78, %v149
    %151 = vmatmul.f32.gmra.mxu0 %v108
    %v152 = vpop.f32.mrf.mxu0
    %v153 = vadd.f32 %v83, %v152
    %154 = vdwg.mxu0
    %v155 = vmax.f32 %v132, 0.0
    %v156 = vmax.f32 %v135, 0.0
    %v157 = vmax.f32 %v138, 0.0
    %v158 = vmax.f32 %v141, 0.0
    %v159 = vmax.f32 %v144, 0.0
    %v160 = vmax.f32 %v147, 0.0
    %v161 = vmax.f32 %v150, 0.0
    %v162 = vmax.f32 %v153, 0.0
    %v163 = vld [vmem:[%s3] sm:$0xff]
    %v164 = vld [vmem:[%s3 + $0x8] sm:$0xff]
    %v165 = vld [vmem:[%s4] sm:$0xff]
    %v166 = vld [vmem:[%s4 + $0x8] sm:$0xff]
    %168 = vset.pattern.permute.xlu0 0
    %169 = vperm.xlu0 %168, %v165
    %v170 = vpop.permute.xlu0 %169
    %173 = vset.pattern.permute.xlu0 0
    %174 = vperm.xlu0 %173, %v166
    %v175 = vpop.permute.xlu0 %174
    %vm177 = vcmask 523264
    %v179 = vsel %vm177, %v163, 0
    %v182 = vsel %vm177, %v164, 0
    %184 = vmatpush.msra.mxu0 0.0
    %185 = vmatpush.msra.mxu0 0.0
    %186 = vmatpush.msra.mxu0 0.0
    %187 = vmatpush.msra.mxu0 0.0
    %188 = vmatpush.msra.mxu0 0.0
    %189 = vmatpush.msra.mxu0 0.0
    %190 = vmatpush.msra.mxu0 0.0
    %191 = vmatpush.msra.mxu0 0.0
    %192 = vmatpush.msra.mxu0 %v162
    %193 = vmatpush.msra.mxu0 %v161
    %194 = vmatpush.msra.mxu0 %v160
    %195 = vmatpush.msra.mxu0 %v159
    %196 = vmatpush.msra.mxu0 %v158
    %197 = vmatpush.msra.mxu0 %v157
    %198 = vmatpush.msra.mxu0 %v156
    %199 = vmatpush.msra.mxu0 %v155
    %200 = vmatmul.f32.gmra.mxu0 %v179
    %v201 = vpop.f32.mrf.mxu0
    %v202 = vadd.f32 %v170, %v201
    %203 = vmatmul.f32.gmra.mxu0 %v182
    %v204 = vpop.f32.mrf.mxu0
    %v205 = vadd.f32 %v175, %v204
    %206 = vdwg.mxu0
    %v207 = vmax.f32 %v202, 0.0
    %v208 = vmax.f32 %v205, 0.0
    %v209 = vld [vmem:[%s5] sm:$0x7]
    %v210 = vld [vmem:[%s6] sm:$0x7]
    %212 = vset.pattern.permute.xlu0 0
    %213 = vperm.xlu0 %212, %v210
    %v214 = vpop.permute.xlu0 %213
    %vm216 = vcmask 130048
    %v218 = vsel %vm216, %v209, 0
    %220 = vmatpush.msra.mxu0 0.0
    %221 = vmatpush.msra.mxu0 0.0
    %222 = vmatpush.msra.mxu0 0.0
    %223 = vmatpush.msra.mxu0 0.0
    %224 = vmatpush.msra.mxu0 0.0
    %225 = vmatpush.msra.mxu0 0.0
    %226 = vmatpush.msra.mxu0 0.0
    %227 = vmatpush.msra.mxu0 0.0
    %228 = vmatpush.msra.mxu0 0.0
    %229 = vmatpush.msra.mxu0 0.0
    %230 = vmatpush.msra.mxu0 0.0
    %231 = vmatpush.msra.mxu0 0.0
    %232 = vmatpush.msra.mxu0 0.0
    %233 = vmatpush.msra.mxu0 0.0
    %234 = vmatpush.msra.mxu0 %v208
    %235 = vmatpush.msra.mxu0 %v207
    %236 = vmatmul.f32.gmra.mxu0 %v218
    %v237 = vpop.f32.mrf.mxu0
    %v238 = vadd.f32 %v214, %v237
    %239 = vdwg.mxu0
    %240 = vst [vmem:[#allocation2] sm:$0x7] %v238
    // Predicated region
    $region30: #{tpu_custom_call.1} parent=1 // pred_check
      _
    $region31: #{tpu_custom_call.1} parent=1 // pred_check_branch
      %242 = sbr.rel (0) target = $region33
    $region32: #{tpu_custom_call.1} parent=1 // pred_region
      %244 = vsyncadd [#allocation3], 0
      %s246 = sshll.u32 [#allocation2], 4
      %s247 = int_to_ptr.vmem [resolvable:$true] %s246
      %s248 = sshll.u32 %s7, 4
      %s249 = int_to_ptr.hbm [resolvable:$true] %s248
      %251 = dma.vmem_to_hbm [thread:$0]  %s247, 64, %s249, [#allocation3]
    $region33: #{tpu_custom_call.1} parent=1 // pred_fallthru
      _
    // Predicated region
    $region34: #{tpu_custom_call.1} parent=1 // pred_check
      _
    $region35: #{tpu_custom_call.1} parent=1 // pred_check_branch
      %253 = sbr.rel (0) target = $region37
    $region36: #{tpu_custom_call.1} parent=1 // pred_region
      %255 = dma.done [#allocation3], 64
    $region37: #{tpu_custom_call.1} parent=1 // pred_fallthru
      _
    %256 = vsyncpa [#allocation3], 1

</llo_original>
